<compile_context>
chip_gen: v5e
topology: v5e:2x2
jax: 0.10.0
libtpu: 0.0.40
codegen_flags: <defaults>
</compile_context>

<pallas_src>
import functools

import jax
import jax.numpy as jnp
from jax import lax
from jax.experimental import pallas as pl
from jax.experimental.pallas import tpu as pltpu


def _round_up(v, m):
    return ((v + m - 1) // m) * m


def gat_attention_kernel(f2max_ref, x_ref, c1_ref, f2_ref, attn_ref, *, alpha):
    """One row tile: attn[TM, NP] = softmax(LeakyReLU(f1 + f2), axis=1)."""
    # f1_i = x_i . c1 for this row tile; tiny reduction over F_in on VPU/XLU
    # (avoids wasting an MXU pass on a lane-width-1 matvec).
    f1 = jnp.sum(x_ref[...] * c1_ref[...], axis=1, keepdims=True)      # [TM, 1]
    f2 = f2_ref[...]                                                   # [1, NP]

    # Closed-form row max (LeakyReLU is monotone non-decreasing for alpha >= 0).
    m = f1 + f2max_ref[0]
    row_max = jnp.where(m > 0, m, alpha * m)                           # [TM, 1]

    e = f1 + f2                                                        # [TM, NP] (VPU broadcast add)
    e = jnp.where(e > 0, e, alpha * e)                                 # LeakyReLU
    p = jnp.exp(e - row_max)                                           # EUP, once per element
    denom = jnp.sum(p, axis=1, keepdims=True)                          # [TM, 1] XLU reduce
    r = pl.reciprocal(denom, approx=True)                              # EUP vrcp (nearly free)
    r = r * (2.0 - denom * r)          # one Newton step on [TM,1] -> ~f32 accuracy
    attn_ref[...] = p * r


def graph_attention_layer(x, adj, W, a, alpha, *, row_tile=128):
    """softmax(LeakyReLU([h_i || h_j] @ a), dim=1) with h = x @ W.

    `adj` is intentionally unused: the reference PyTorch forward never applies
    it (no adjacency masking before the softmax)."""
    del adj  # unused by the PyTorch forward being reproduced
    N, f_in = x.shape
    f_out = W.shape[1]

    hp = lax.Precision.HIGHEST  # tiny matvecs; keep them exact f32

    # Fold W into the attention vector:  e_ij = LRelu(x_i.c1 + x_j.c2)
    a1 = a[:f_out, :]
    a2 = a[f_out:, :]
    c1 = jnp.dot(W, a1, precision=hp).astype(jnp.float32)              # [F_in, 1]
    c2 = jnp.dot(W, a2, precision=hp).astype(jnp.float32)              # [F_in, 1]
    c1_row = c1.reshape(1, f_in)                                       # row layout for VPU

    # f2 once, in row layout; its max gives the closed-form row max.
    f2_row = jnp.dot(x.astype(jnp.float32), c2, precision=hp).reshape(1, N)   # [1, N]
    f2_max = jnp.max(f2_row).reshape(1).astype(jnp.float32)            # [1] -> SMEM scalar

    # Padding: lane-dense (multiple-of-128) columns, multiple-of-8 row tiles.
    tm = min(int(row_tile), _round_up(N, 8))
    n_rows = _round_up(N, tm)
    n_cols = _round_up(N, 128)

    x_p = jnp.zeros((n_rows, f_in), jnp.float32).at[:N, :].set(x.astype(jnp.float32))
    # Padded columns get a very negative score so exp() underflows to 0 and
    # they never contribute to the softmax denominator.
    f2_p = jnp.full((1, n_cols), -1e30, jnp.float32).at[:, :N].set(f2_row)

    grid = (n_rows // tm,)

    cost = pl.CostEstimate(
        flops=6 * n_rows * n_cols + 2 * n_rows * f_in,
        transcendentals=n_rows * n_cols,
        bytes_accessed=4 * (n_rows * n_cols + n_rows * f_in + n_cols + 1),
    )

    # Double-buffered output tile + inputs; raise the scoped VMEM limit only
    # if the tiles actually need it (matters for large N / large row_tile).
    needed_vmem = 2 * 4 * (tm * n_cols + tm * f_in + n_cols) + (2 << 20)
    vmem_limit = None if needed_vmem <= (32 << 20) else min(needed_vmem, 100 << 20)

    kernel = functools.partial(gat_attention_kernel, alpha=float(alpha))

    attn_padded = pl.pallas_call(
        kernel,
        out_shape=jax.ShapeDtypeStruct((n_rows, n_cols), jnp.float32),
        grid=grid,
        in_specs=[
            pl.BlockSpec(memory_space=pltpu.MemorySpace.SMEM),     # f2_max [1]
            pl.BlockSpec((tm, f_in), lambda i: (i, 0)),            # x row tile
            pl.BlockSpec((1, f_in), lambda i: (0, 0)),             # c1 (row layout)
            pl.BlockSpec((1, n_cols), lambda i: (0, 0)),           # f2 row (constant)
        ],
        out_specs=pl.BlockSpec((tm, n_cols), lambda i: (i, 0)),
        compiler_params=pltpu.CompilerParams(
            dimension_semantics=("parallel",),
            vmem_limit_bytes=vmem_limit,
        ),
        cost_estimate=cost,
    )(f2_max, x_p, c1_row, f2_p)

    return attn_padded[:N, :N]


def xavier_uniform(key, shape, gain):
    fan_in, fan_out = shape[0], shape[1]
    bound = gain * jnp.sqrt(6.0 / (fan_in + fan_out))
    return jax.random.uniform(key, shape, jnp.float32, minval=-bound, maxval=bound)


if __name__ == "__main__":
    # Small shapes consistent with the module: N nodes, in_features -> out_features.
    N, in_features, out_features = 8, 16, 32
    alpha = 0.2

    key = jax.random.PRNGKey(0)
    k_x, k_adj, k_w, k_a = jax.random.split(key, 4)

    # Deterministic parameter init mirroring nn.init.xavier_uniform_(gain=1.414).
    W = xavier_uniform(k_w, (in_features, out_features), gain=1.414)
    a = xavier_uniform(k_a, (2 * out_features, 1), gain=1.414)

    x = jax.random.normal(k_x, (N, in_features), jnp.float32)
    adj = (jax.random.uniform(k_adj, (N, N)) > 0.5).astype(jnp.float32)  # unused in forward

    attn = graph_attention_layer(x, adj, W, a, alpha)
    attn = jax.block_until_ready(attn)

    # Pure-JAX reference (same math as the PyTorch module) for a sanity check.
    h_ref = jnp.dot(x, W, precision=lax.Precision.HIGHEST)
    a_input = jnp.concatenate(
        [jnp.broadcast_to(h_ref[:, None, :], (N, N, out_features)),
         jnp.broadcast_to(h_ref[None, :, :], (N, N, out_features))], axis=-1)
    e_ref = jnp.einsum("ijk,kl->ij", a_input, a, precision=lax.Precision.HIGHEST)
    e_ref = jnp.where(e_ref > 0, e_ref, alpha * e_ref)
    attn_ref = jax.nn.softmax(e_ref, axis=1)

    assert attn.shape == (N, N)
    assert jnp.allclose(attn, attn_ref, atol=1e-4, rtol=1e-4), "mismatch vs reference"
    assert jnp.allclose(jnp.sum(attn, axis=1), jnp.ones((N,)), atol=1e-4), "rows not normalized"

    print("KERNEL_OK")
</pallas_src>

<mosaic_0001>
module attributes {stable_mosaic.version = 11 : i64} {
  func.func @gat_attention_kernel(%arg0: i32, %arg1: memref<1xf32, #tpu.memory_space<smem>>, %arg2: memref<8x16xf32, #tpu.memory_space<vmem>>, %arg3: memref<1x16xf32, #tpu.memory_space<vmem>>, %arg4: memref<1x128xf32, #tpu.memory_space<vmem>>, %arg5: memref<8x128xf32, #tpu.memory_space<vmem>>) attributes {dimension_semantics = [#tpu.dimension_semantics<parallel>], iteration_bounds = array<i64: 1>, scalar_prefetch = 0 : i64, scratch_operands = 0 : i64, tpu.core_type = #tpu.core_type<tc>, window_params = [{transform_indices = @transform_0, window_bounds = array<i64: 1>}, {transform_indices = @transform_1, window_bounds = array<i64: 8, 16>}, {pipeline_mode = #tpu.pipeline_mode<synchronous>, transform_indices = @transform_2, window_bounds = array<i64: 1, 16>}, {pipeline_mode = #tpu.pipeline_mode<synchronous>, transform_indices = @transform_3, window_bounds = array<i64: 1, 128>}, {transform_indices = @transform_4, window_bounds = array<i64: 8, 128>}]} {
    %c0 = arith.constant 0 : index
    %c0_0 = arith.constant 0 : index
    %0 = vector.load %arg2[%c0, %c0_0] : memref<8x16xf32, #tpu.memory_space<vmem>>, vector<8x16xf32>
    %c0_1 = arith.constant 0 : index
    %c0_2 = arith.constant 0 : index
    %1 = vector.load %arg3[%c0_1, %c0_2] : memref<1x16xf32, #tpu.memory_space<vmem>>, vector<1x16xf32>
    %2 = vector.broadcast %1 : vector<1x16xf32> to vector<8x16xf32>
    %3 = arith.mulf %0, %2 : vector<8x16xf32>
    %cst = arith.constant dense<0.000000e+00> : vector<8xf32>
    %4 = vector.multi_reduction <add>, %3, %cst [1] : vector<8x16xf32> to vector<8xf32>
    %5 = vector.shape_cast %4 : vector<8xf32> to vector<8x1xf32>
    %c0_3 = arith.constant 0 : index
    %c0_4 = arith.constant 0 : index
    %6 = vector.load %arg4[%c0_3, %c0_4] : memref<1x128xf32, #tpu.memory_space<vmem>>, vector<1x128xf32>
    %c0_5 = arith.constant 0 : index
    %7 = memref.load %arg1[%c0_5] : memref<1xf32, #tpu.memory_space<smem>>
    %8 = vector.broadcast %7 : f32 to vector<8x1xf32>
    %9 = arith.addf %5, %8 : vector<8x1xf32>
    %cst_6 = arith.constant 0.000000e+00 : f32
    %10 = vector.broadcast %cst_6 : f32 to vector<8x1xf32>
    %11 = arith.cmpf ogt, %9, %10 : vector<8x1xf32>
    %cst_7 = arith.constant 2.000000e-01 : f32
    %12 = vector.broadcast %cst_7 : f32 to vector<8x1xf32>
    %13 = arith.mulf %12, %9 : vector<8x1xf32>
    %14 = arith.select %11, %9, %13 : vector<8x1xi1>, vector<8x1xf32>
    %15 = vector.broadcast %5 : vector<8x1xf32> to vector<8x128xf32>
    %16 = vector.broadcast %6 : vector<1x128xf32> to vector<8x128xf32>
    %17 = arith.addf %15, %16 : vector<8x128xf32>
    %cst_8 = arith.constant 0.000000e+00 : f32
    %18 = vector.broadcast %cst_8 : f32 to vector<8x128xf32>
    %19 = arith.cmpf ogt, %17, %18 : vector<8x128xf32>
    %cst_9 = arith.constant 2.000000e-01 : f32
    %20 = vector.broadcast %cst_9 : f32 to vector<8x128xf32>
    %21 = arith.mulf %20, %17 : vector<8x128xf32>
    %22 = arith.select %19, %17, %21 : vector<8x128xi1>, vector<8x128xf32>
    %23 = vector.broadcast %14 : vector<8x1xf32> to vector<8x128xf32>
    %24 = arith.subf %22, %23 : vector<8x128xf32>
    %25 = math.exp %24 : vector<8x128xf32>
    %cst_10 = arith.constant dense<0.000000e+00> : vector<8xf32>
    %26 = vector.multi_reduction <add>, %25, %cst_10 [1] : vector<8x128xf32> to vector<8xf32>
    %27 = vector.shape_cast %26 : vector<8xf32> to vector<8x1xf32>
    %28 = tpu.reciprocal %27 {approx = true} : vector<8x1xf32> -> vector<8x1xf32>
    %29 = arith.mulf %27, %28 : vector<8x1xf32>
    %cst_11 = arith.constant 2.000000e+00 : f32
    %30 = vector.broadcast %cst_11 : f32 to vector<8x1xf32>
    %31 = arith.subf %30, %29 : vector<8x1xf32>
    %32 = arith.mulf %28, %31 : vector<8x1xf32>
    %33 = vector.broadcast %32 : vector<8x1xf32> to vector<8x128xf32>
    %34 = arith.mulf %25, %33 : vector<8x128xf32>
    %c0_12 = arith.constant 0 : index
    %c0_13 = arith.constant 0 : index
    %35 = vector.load %arg5[%c0_12, %c0_13] : memref<8x128xf32, #tpu.memory_space<vmem>>, vector<8x128xf32>
    tpu.vector_store %arg5[%c0_12, %c0_13], %34 {strides = array<i32>} : memref<8x128xf32, #tpu.memory_space<vmem>>, vector<8x128xf32>,
    return
  }
  func.func @transform_0(%arg0: i32) -> i32 {
    %c0_i32 = arith.constant 0 : i32
    %c0_i32_0 = arith.constant 0 : i32
    return %c0_i32 : i32
  }
  func.func @transform_1(%arg0: i32) -> (i32, i32) {
    %c0_i32 = arith.constant 0 : i32
    %c0_i32_0 = arith.constant 0 : i32
    return %arg0, %c0_i32 : i32, i32
  }
  func.func @transform_2(%arg0: i32) -> (i32, i32) {
    %c0_i32 = arith.constant 0 : i32
    %c0_i32_0 = arith.constant 0 : i32
    %c0_i32_1 = arith.constant 0 : i32
    return %c0_i32, %c0_i32_0 : i32, i32
  }
  func.func @transform_3(%arg0: i32) -> (i32, i32) {
    %c0_i32 = arith.constant 0 : i32
    %c0_i32_0 = arith.constant 0 : i32
    %c0_i32_1 = arith.constant 0 : i32
    return %c0_i32, %c0_i32_0 : i32, i32
  }
  func.func @transform_4(%arg0: i32) -> (i32, i32) {
    %c0_i32 = arith.constant 0 : i32
    %c0_i32_0 = arith.constant 0 : i32
    return %arg0, %c0_i32 : i32, i32
  }
}

</mosaic_0001>

<llo_original>
// kernel: tpu_custom_call.1
$region0: #{tpu_custom_call.1}
  #allocation0 [shape = 'u32[]', space=smem, size = 0x4, offset = 0x4, fixed_abs, tag = 'smem constant byte address 0x4 - core index']
  #allocation1 [shape = 'u32[72,128]{1,0:T(1,128)}', space=vmem, size = 0x9000, scoped, tag = 'internal scratch']
  #allocation2 [shape = 'f32[1]{0:T(128)S(6)}', space=smem, size = 0x200, scoped, tag = 'scoped memory for tpu_custom_call.1']
  %s0 = inlined_call_operand.<no memory space> [shape: f32[1], index: 0, kind: input, shape index: {}]
  %s1 = inlined_call_operand.hbm [shape: f32[8,16], index: 1, kind: input, shape index: {}]
  %s2 = inlined_call_operand.vmem [shape: f32[1,16], index: 2, kind: input, shape index: {}]
  %s3 = inlined_call_operand.vmem [shape: f32[1,128], index: 3, kind: input, shape index: {}]
  %s4 = inlined_call_operand.hbm [shape: f32[8,128], index: 4, kind: output, shape index: {}]
  %s5 = sld [smem:[#allocation0]]
  $region30: #{tpu_custom_call.1} parent=0
    _
  %s7 = ssub.s32 1, %s5
  %s8 = scalar_select 0, %s7, %s5
  %9 = sst [smem:[#allocation2]] %s0
  $region1: #{tpu_custom_call.1} parent=0
    #allocation3 [shape = 'u8[4096]{0}', space=vmem, size = 0x1000, scoped, tag = 'input window, operand 1, single buffered']
    #allocation4 [shape = 's32[1]{0}', space=sflag, size = 0x4, scoped, tag = 'scoped memory for tpu_custom_call.1']
    #allocation5 [shape = 's32[1]{0}', space=sflag, size = 0x4, scoped, tag = 'scoped memory for tpu_custom_call.1']
    #allocation6 [shape = 'u8[4096]{0}', space=vmem, size = 0x1000, scoped, tag = 'output window, operand 0, single buffered']
    %10 = vsyncpa [#allocation4], 0
    %11 = vsyncpa [#allocation5], 0
    // Predicated region
    $region2: #{tpu_custom_call.1} parent=1 // pred_check
      _
    $region3: #{tpu_custom_call.1} parent=1 // pred_check_branch
      %13 = sbr.rel (0) target = $region5
    $region4: #{tpu_custom_call.1} parent=1 // pred_region
      _
    $region5: #{tpu_custom_call.1} parent=1 // pred_fallthru
      _
    // Predicated region
    $region6: #{tpu_custom_call.1} parent=1 // pred_check
      _
    $region7: #{tpu_custom_call.1} parent=1 // pred_check_branch
      %15 = sbr.rel (0) target = $region9
    $region8: #{tpu_custom_call.1} parent=1 // pred_region
      %17 = vsyncadd [#allocation4], 0
      %s19 = sshll.u32 %s1, 4
      %s20 = int_to_ptr.hbm [resolvable:$true] %s19
      %s21 = sshll.u32 [#allocation3], 4
      %s22 = int_to_ptr.vmem [resolvable:$true] %s21
      %24 = dma.hbm_to_vmem [thread:$0]  %s20, 128, %s22, [#allocation4]
    $region9: #{tpu_custom_call.1} parent=1 // pred_fallthru
      _
    // Predicated region
    $region10: #{tpu_custom_call.1} parent=1 // pred_check
      _
    $region11: #{tpu_custom_call.1} parent=1 // pred_check_branch
      %26 = sbr.rel (0) target = $region13
    $region12: #{tpu_custom_call.1} parent=1 // pred_region
      _
    $region13: #{tpu_custom_call.1} parent=1 // pred_fallthru
      _
    // Predicated region
    $region14: #{tpu_custom_call.1} parent=1 // pred_check
      _
    $region15: #{tpu_custom_call.1} parent=1 // pred_check_branch
      %28 = sbr.rel (0) target = $region17
    $region16: #{tpu_custom_call.1} parent=1 // pred_region
      _
    $region17: #{tpu_custom_call.1} parent=1 // pred_fallthru
      _
    // Predicated region
    $region18: #{tpu_custom_call.1} parent=1 // pred_check
      _
    $region19: #{tpu_custom_call.1} parent=1 // pred_check_branch
      %30 = sbr.rel (0) target = $region21
    $region20: #{tpu_custom_call.1} parent=1 // pred_region
      %32 = dma.done [#allocation4], 128
    $region21: #{tpu_custom_call.1} parent=1 // pred_fallthru
      _
    %v33 = vld [vmem:[#allocation3] sm:$0xff]
    %v34 = vld [vmem:[%s2] sm:$0x1]
    %v36 = vperm.slane %v34, 0
    %v38 = vmul.f32 %v33, %v36
    %vm39 = vcmask 130048
    %v40 = vsel %vm39, %v38, 0.0
    %41 = vadd.xlane.f32.xlu0 %v40
    %v42 = vpop.xlane.xlu0 %41
    %v43 = vld [vmem:[%s3] sm:$0x1]
    %s44 = sld [smem:[#allocation2]]
    %v45 = vstv %s44
    %v46 = vadd.f32 %v42, %v45
    %vm47 = vcmp.gt.f32.partialorder %v46, 0.0
    %v48 = vmul.f32 %v46, 0.2
    %v49 = vsel %vm47, %v46, %v48
    %v51 = vperm.slane %v43, 0
    %v53 = vadd.f32 %v42, %v51
    %vm54 = vcmp.gt.f32.partialorder %v53, 0.0
    %v55 = vmul.f32 %v53, 0.2
    %v56 = vsel %vm54, %v53, %v55
    %v57 = vsub.f32 %v56, %v49
    %v58 = vmul.f32 %v57, 1.442695
    %v59 = vpow.pop %v58
    %60 = vadd.xlane.f32.xlu0 %v59
    %v61 = vpop.xlane.xlu0 %60
    %v62 = vrcp.pop %v61
    %v63 = vmul.f32 %v61, %v62
    %v64 = vsub.f32 2.0, %v63
    %v65 = vmul.f32 %v62, %v64
    %v66 = vmul.f32 %v59, %v65
    %67 = vst [vmem:[#allocation6] sm:$0xff] %v66
    // Predicated region
    $region22: #{tpu_custom_call.1} parent=1 // pred_check
      _
    $region23: #{tpu_custom_call.1} parent=1 // pred_check_branch
      %69 = sbr.rel (0) target = $region25
    $region24: #{tpu_custom_call.1} parent=1 // pred_region
      %71 = vsyncadd [#allocation5], 0
      %s73 = sshll.u32 [#allocation6], 4
      %s74 = int_to_ptr.vmem [resolvable:$true] %s73
      %s75 = sshll.u32 %s4, 4
      %s76 = int_to_ptr.hbm [resolvable:$true] %s75
      %78 = dma.vmem_to_hbm [thread:$0]  %s74, 128, %s76, [#allocation5]
    $region25: #{tpu_custom_call.1} parent=1 // pred_fallthru
      _
    // Predicated region
    $region26: #{tpu_custom_call.1} parent=1 // pred_check
      _
    $region27: #{tpu_custom_call.1} parent=1 // pred_check_branch
      %80 = sbr.rel (0) target = $region29
    $region28: #{tpu_custom_call.1} parent=1 // pred_region
      %82 = dma.done [#allocation5], 128
    $region29: #{tpu_custom_call.1} parent=1 // pred_fallthru
      _
    %83 = vsyncpa [#allocation4], 1
    %84 = vsyncpa [#allocation5], 1

</llo_original>
